<compile_context>
chip_gen: v7x
topology: tpu7x:2x2x1
jax: 0.10.0
libtpu: 0.0.40
codegen_flags: <defaults>
</compile_context>

<pallas_src>
import jax
import jax.numpy as jnp
from jax.experimental import pallas as pl
from jax.experimental.pallas import tpu as pltpu


def _add_kernel(a_ref, b_ref, o_ref):
    # Whole-tile elementwise add on the VPU (unmasked lane-dense stores).
    o_ref[...] = a_ref[...] + b_ref[...]


_LANE = 128          # TPU lane width: lane-dense last dim -> unmasked vst
_BLOCK_ROWS = 2048   # 2048x128 f32 = 1 MiB/block; 3 arrays x 2 bufs ~ 6 MiB VMEM


def _cost_estimate(total: int, dtype) -> pl.CostEstimate:
    itemsize = jnp.dtype(dtype).itemsize
    return pl.CostEstimate(
        flops=total,
        transcendentals=0,
        bytes_accessed=3 * total * itemsize,  # 2 reads + 1 write
    )


def residual_add(x439: jax.Array, x425: jax.Array) -> jax.Array:
    assert x439.shape == x425.shape and x439.dtype == x425.dtype
    orig_shape = x439.shape
    total = x439.size

    if total % _LANE != 0:
        # Non-lane-dense element count: a Pallas launch would need masked
        # partial stores (and a huge single VMEM tile for big inputs).
        # XLA's fused add is strictly better here.
        return x439 + x425

    # Lane-dense 2-D slab: last dim exactly one lane group -> unmasked stores.
    rows = total // _LANE
    a2 = x439.reshape(rows, _LANE)
    b2 = x425.reshape(rows, _LANE)
    cost = _cost_estimate(total, x439.dtype)

    if rows > _BLOCK_ROWS:
        # Large-input path: tiled grid over rows (>= 2 steps), megacore-parallel
        # so both v7x TensorCores stream halves of the tensor.
        out2 = pl.pallas_call(
            _add_kernel,
            out_shape=jax.ShapeDtypeStruct(a2.shape, a2.dtype),
            grid=(pl.cdiv(rows, _BLOCK_ROWS),),
            in_specs=[
                pl.BlockSpec((_BLOCK_ROWS, _LANE), lambda i: (i, 0)),
                pl.BlockSpec((_BLOCK_ROWS, _LANE), lambda i: (i, 0)),
            ],
            out_specs=pl.BlockSpec((_BLOCK_ROWS, _LANE), lambda i: (i, 0)),
            compiler_params=pltpu.CompilerParams(
                dimension_semantics=("parallel",)
            ),
            cost_estimate=cost,
        )(a2, b2)
    else:
        # Tiny tensor (43,904 elems -> (343, 128), ~172 KiB/operand):
        # single full-VMEM tile, no grid.
        out2 = pl.pallas_call(
            _add_kernel,
            out_shape=jax.ShapeDtypeStruct(a2.shape, a2.dtype),
            cost_estimate=cost,
        )(a2, b2)

    return out2.reshape(orig_shape)


if __name__ == "__main__":
    key = jax.random.PRNGKey(0)
    k1, k2 = jax.random.split(key)
    # Shapes matching the module's forward: [1, 224, 14, 14]
    x439 = jax.random.normal(k1, (1, 224, 14, 14), dtype=jnp.float32)
    x425 = jax.random.normal(k2, (1, 224, 14, 14), dtype=jnp.float32)

    # Pure-JAX reference.
    ref = x439 + x425

    out = residual_add(x439, x425)
    jax.block_until_ready(out)

    assert out.shape == ref.shape and out.dtype == ref.dtype
    assert jnp.allclose(out, ref), "mismatch vs reference add"

    print("KERNEL_OK")
</pallas_src>

<mosaic_0001>
module attributes {stable_mosaic.version = 11 : i64} {
  func.func @_add_kernel(%arg0: memref<343x128xf32, #tpu.memory_space<vmem>>, %arg1: memref<343x128xf32, #tpu.memory_space<vmem>>, %arg2: memref<343x128xf32, #tpu.memory_space<vmem>>) attributes {dimension_semantics = [], scalar_prefetch = 0 : i64, scratch_operands = 0 : i64, tpu.core_type = #tpu.core_type<tc>} {
    %c0 = arith.constant 0 : index
    %c0_0 = arith.constant 0 : index
    %0 = vector.load %arg0[%c0, %c0_0] : memref<343x128xf32, #tpu.memory_space<vmem>>, vector<343x128xf32>
    %c0_1 = arith.constant 0 : index
    %c0_2 = arith.constant 0 : index
    %1 = vector.load %arg1[%c0_1, %c0_2] : memref<343x128xf32, #tpu.memory_space<vmem>>, vector<343x128xf32>
    %2 = arith.addf %0, %1 : vector<343x128xf32>
    %c0_3 = arith.constant 0 : index
    %c0_4 = arith.constant 0 : index
    %3 = vector.load %arg2[%c0_3, %c0_4] : memref<343x128xf32, #tpu.memory_space<vmem>>, vector<343x128xf32>
    tpu.vector_store %arg2[%c0_3, %c0_4], %2 {strides = array<i32>} : memref<343x128xf32, #tpu.memory_space<vmem>>, vector<343x128xf32>,
    return
  }
}

</mosaic_0001>

<llo_original>
// kernel: tpu_custom_call.1
$region0: #{tpu_custom_call.1}
  #allocation0 [shape = 'u32[]', space=smem, size = 0x4, offset = 0x4, fixed_abs, tag = 'smem constant byte address 0x4 - core index']
  #allocation1 [shape = 'u32[144,128]{1,0:T(1,128)}', space=vmem, size = 0x12000, scoped, tag = 'internal scratch']
  %s0 = inlined_call_operand.hbm [shape: f32[343,128], index: 0, kind: input, shape index: {}]
  %s1 = inlined_call_operand.hbm [shape: f32[343,128], index: 1, kind: input, shape index: {}]
  %s2 = inlined_call_operand.hbm [shape: f32[343,128], index: 2, kind: output, shape index: {}]
  %s3 = sld [smem:[#allocation0]]
  $region26: #{tpu_custom_call.1} parent=0
    _
  %s5 = ssub.s32 1, %s3
  %s6 = scalar_select 0, %s5, %s3
  $region1: #{tpu_custom_call.1} parent=0
    #allocation2 [shape = 'u8[176128]{0}', space=vmem, size = 0x2b000, scoped, tag = 'input window, operand 0, single buffered']
    #allocation3 [shape = 's32[1]{0}', space=sflag, size = 0x4, scoped, tag = 'scoped memory for tpu_custom_call.1']
    #allocation4 [shape = 's32[1]{0}', space=sflag, size = 0x4, scoped, tag = 'scoped memory for tpu_custom_call.1']
    #allocation5 [shape = 'u8[176128]{0}', space=vmem, size = 0x2b000, scoped, tag = 'input window, operand 1, single buffered']
    #allocation6 [shape = 's32[1]{0}', space=sflag, size = 0x4, scoped, tag = 'scoped memory for tpu_custom_call.1']
    #allocation7 [shape = 'u8[176128]{0}', space=vmem, size = 0x2b000, scoped, tag = 'output window, operand 0, single buffered']
    %7 = vsyncpa [#allocation3], 0
    %8 = vsyncpa [#allocation6], 0
    %9 = vsyncpa [#allocation4], 0
    // Predicated region
    $region2: #{tpu_custom_call.1} parent=1 // pred_check
      _
    $region3: #{tpu_custom_call.1} parent=1 // pred_check_branch
      %11 = sbr.rel (0) target = $region5
    $region4: #{tpu_custom_call.1} parent=1 // pred_region
      %s13 = ssub.s32 5504, 5504
      %14 = vsyncadd [#allocation3], %s13
      %s15 = sshll.u32 [#allocation2], 4
      %s16 = int_to_ptr.vmem [resolvable:$true] %s15
      %21 = dma.hbm_to_vmem [thread:$0]  %s0, 5504, %s16, [#allocation3], 128, 128, 8
    $region5: #{tpu_custom_call.1} parent=1 // pred_fallthru
      _
    // Predicated region
    $region6: #{tpu_custom_call.1} parent=1 // pred_check
      _
    $region7: #{tpu_custom_call.1} parent=1 // pred_check_branch
      %23 = sbr.rel (0) target = $region9
    $region8: #{tpu_custom_call.1} parent=1 // pred_region
      %s25 = ssub.s32 5504, 5504
      %26 = vsyncadd [#allocation6], %s25
      %s27 = sshll.u32 [#allocation5], 4
      %s28 = int_to_ptr.vmem [resolvable:$true] %s27
      %33 = dma.hbm_to_vmem [thread:$0]  %s1, 5504, %s28, [#allocation6], 128, 128, 8
    $region9: #{tpu_custom_call.1} parent=1 // pred_fallthru
      _
    // Predicated region
    $region10: #{tpu_custom_call.1} parent=1 // pred_check
      _
    $region11: #{tpu_custom_call.1} parent=1 // pred_check_branch
      %35 = sbr.rel (0) target = $region13
    $region12: #{tpu_custom_call.1} parent=1 // pred_region
      %36 = dma.done [#allocation3], 5504
    $region13: #{tpu_custom_call.1} parent=1 // pred_fallthru
      _
    // Predicated region
    $region14: #{tpu_custom_call.1} parent=1 // pred_check
      _
    $region15: #{tpu_custom_call.1} parent=1 // pred_check_branch
      %38 = sbr.rel (0) target = $region17
    $region16: #{tpu_custom_call.1} parent=1 // pred_region
      %39 = dma.done [#allocation6], 5504
    $region17: #{tpu_custom_call.1} parent=1 // pred_fallthru
      _
    %v40 = vld [vmem:[#allocation2] sm:$0xff]
    %v41 = vld [vmem:[#allocation2 + $0x8] sm:$0xff]
    %v42 = vld [vmem:[#allocation2 + $0x10] sm:$0xff]
    %v43 = vld [vmem:[#allocation2 + $0x18] sm:$0xff]
    %v44 = vld [vmem:[#allocation2 + $0x20] sm:$0xff]
    %v45 = vld [vmem:[#allocation2 + $0x28] sm:$0xff]
    %v46 = vld [vmem:[#allocation2 + $0x30] sm:$0xff]
    %v47 = vld [vmem:[#allocation2 + $0x38] sm:$0xff]
    %v48 = vld [vmem:[#allocation2 + $0x40] sm:$0xff]
    %v49 = vld [vmem:[#allocation2 + $0x48] sm:$0xff]
    %v50 = vld [vmem:[#allocation2 + $0x50] sm:$0xff]
    %v51 = vld [vmem:[#allocation2 + $0x58] sm:$0xff]
    %v52 = vld [vmem:[#allocation2 + $0x60] sm:$0xff]
    %v53 = vld [vmem:[#allocation2 + $0x68] sm:$0xff]
    %v54 = vld [vmem:[#allocation2 + $0x70] sm:$0xff]
    %v55 = vld [vmem:[#allocation2 + $0x78] sm:$0xff]
    %v56 = vld [vmem:[#allocation2 + $0x80] sm:$0xff]
    %v57 = vld [vmem:[#allocation2 + $0x88] sm:$0xff]
    %v58 = vld [vmem:[#allocation2 + $0x90] sm:$0xff]
    %v59 = vld [vmem:[#allocation2 + $0x98] sm:$0xff]
    %v60 = vld [vmem:[#allocation2 + $0xa0] sm:$0xff]
    %v61 = vld [vmem:[#allocation2 + $0xa8] sm:$0xff]
    %v62 = vld [vmem:[#allocation2 + $0xb0] sm:$0xff]
    %v63 = vld [vmem:[#allocation2 + $0xb8] sm:$0xff]
    %v64 = vld [vmem:[#allocation2 + $0xc0] sm:$0xff]
    %v65 = vld [vmem:[#allocation2 + $0xc8] sm:$0xff]
    %v66 = vld [vmem:[#allocation2 + $0xd0] sm:$0xff]
    %v67 = vld [vmem:[#allocation2 + $0xd8] sm:$0xff]
    %v68 = vld [vmem:[#allocation2 + $0xe0] sm:$0xff]
    %v69 = vld [vmem:[#allocation2 + $0xe8] sm:$0xff]
    %v70 = vld [vmem:[#allocation2 + $0xf0] sm:$0xff]
    %v71 = vld [vmem:[#allocation2 + $0xf8] sm:$0xff]
    %v72 = vld [vmem:[#allocation2 + $0x100] sm:$0xff]
    %v73 = vld [vmem:[#allocation2 + $0x108] sm:$0xff]
    %v74 = vld [vmem:[#allocation2 + $0x110] sm:$0xff]
    %v75 = vld [vmem:[#allocation2 + $0x118] sm:$0xff]
    %v76 = vld [vmem:[#allocation2 + $0x120] sm:$0xff]
    %v77 = vld [vmem:[#allocation2 + $0x128] sm:$0xff]
    %v78 = vld [vmem:[#allocation2 + $0x130] sm:$0xff]
    %v79 = vld [vmem:[#allocation2 + $0x138] sm:$0xff]
    %v80 = vld [vmem:[#allocation2 + $0x140] sm:$0xff]
    %v81 = vld [vmem:[#allocation2 + $0x148] sm:$0xff]
    %v82 = vld [vmem:[#allocation2 + $0x150] sm:$0x7f]
    %v83 = vld [vmem:[#allocation5] sm:$0xff]
    %v84 = vld [vmem:[#allocation5 + $0x8] sm:$0xff]
    %v85 = vld [vmem:[#allocation5 + $0x10] sm:$0xff]
    %v86 = vld [vmem:[#allocation5 + $0x18] sm:$0xff]
    %v87 = vld [vmem:[#allocation5 + $0x20] sm:$0xff]
    %v88 = vld [vmem:[#allocation5 + $0x28] sm:$0xff]
    %v89 = vld [vmem:[#allocation5 + $0x30] sm:$0xff]
    %v90 = vld [vmem:[#allocation5 + $0x38] sm:$0xff]
    %v91 = vld [vmem:[#allocation5 + $0x40] sm:$0xff]
    %v92 = vld [vmem:[#allocation5 + $0x48] sm:$0xff]
    %v93 = vld [vmem:[#allocation5 + $0x50] sm:$0xff]
    %v94 = vld [vmem:[#allocation5 + $0x58] sm:$0xff]
    %v95 = vld [vmem:[#allocation5 + $0x60] sm:$0xff]
    %v96 = vld [vmem:[#allocation5 + $0x68] sm:$0xff]
    %v97 = vld [vmem:[#allocation5 + $0x70] sm:$0xff]
    %v98 = vld [vmem:[#allocation5 + $0x78] sm:$0xff]
    %v99 = vld [vmem:[#allocation5 + $0x80] sm:$0xff]
    %v100 = vld [vmem:[#allocation5 + $0x88] sm:$0xff]
    %v101 = vld [vmem:[#allocation5 + $0x90] sm:$0xff]
    %v102 = vld [vmem:[#allocation5 + $0x98] sm:$0xff]
    %v103 = vld [vmem:[#allocation5 + $0xa0] sm:$0xff]
    %v104 = vld [vmem:[#allocation5 + $0xa8] sm:$0xff]
    %v105 = vld [vmem:[#allocation5 + $0xb0] sm:$0xff]
    %v106 = vld [vmem:[#allocation5 + $0xb8] sm:$0xff]
    %v107 = vld [vmem:[#allocation5 + $0xc0] sm:$0xff]
    %v108 = vld [vmem:[#allocation5 + $0xc8] sm:$0xff]
    %v109 = vld [vmem:[#allocation5 + $0xd0] sm:$0xff]
    %v110 = vld [vmem:[#allocation5 + $0xd8] sm:$0xff]
    %v111 = vld [vmem:[#allocation5 + $0xe0] sm:$0xff]
    %v112 = vld [vmem:[#allocation5 + $0xe8] sm:$0xff]
    %v113 = vld [vmem:[#allocation5 + $0xf0] sm:$0xff]
    %v114 = vld [vmem:[#allocation5 + $0xf8] sm:$0xff]
    %v115 = vld [vmem:[#allocation5 + $0x100] sm:$0xff]
    %v116 = vld [vmem:[#allocation5 + $0x108] sm:$0xff]
    %v117 = vld [vmem:[#allocation5 + $0x110] sm:$0xff]
    %v118 = vld [vmem:[#allocation5 + $0x118] sm:$0xff]
    %v119 = vld [vmem:[#allocation5 + $0x120] sm:$0xff]
    %v120 = vld [vmem:[#allocation5 + $0x128] sm:$0xff]
    %v121 = vld [vmem:[#allocation5 + $0x130] sm:$0xff]
    %v122 = vld [vmem:[#allocation5 + $0x138] sm:$0xff]
    %v123 = vld [vmem:[#allocation5 + $0x140] sm:$0xff]
    %v124 = vld [vmem:[#allocation5 + $0x148] sm:$0xff]
    %v125 = vld [vmem:[#allocation5 + $0x150] sm:$0x7f]
    %v126 = vadd.f32 %v40, %v83
    %v127 = vadd.f32 %v41, %v84
    %v128 = vadd.f32 %v42, %v85
    %v129 = vadd.f32 %v43, %v86
    %v130 = vadd.f32 %v44, %v87
    %v131 = vadd.f32 %v45, %v88
    %v132 = vadd.f32 %v46, %v89
    %v133 = vadd.f32 %v47, %v90
    %v134 = vadd.f32 %v48, %v91
    %v135 = vadd.f32 %v49, %v92
    %v136 = vadd.f32 %v50, %v93
    %v137 = vadd.f32 %v51, %v94
    %v138 = vadd.f32 %v52, %v95
    %v139 = vadd.f32 %v53, %v96
    %v140 = vadd.f32 %v54, %v97
    %v141 = vadd.f32 %v55, %v98
    %v142 = vadd.f32 %v56, %v99
    %v143 = vadd.f32 %v57, %v100
    %v144 = vadd.f32 %v58, %v101
    %v145 = vadd.f32 %v59, %v102
    %v146 = vadd.f32 %v60, %v103
    %v147 = vadd.f32 %v61, %v104
    %v148 = vadd.f32 %v62, %v105
    %v149 = vadd.f32 %v63, %v106
    %v150 = vadd.f32 %v64, %v107
    %v151 = vadd.f32 %v65, %v108
    %v152 = vadd.f32 %v66, %v109
    %v153 = vadd.f32 %v67, %v110
    %v154 = vadd.f32 %v68, %v111
    %v155 = vadd.f32 %v69, %v112
    %v156 = vadd.f32 %v70, %v113
    %v157 = vadd.f32 %v71, %v114
    %v158 = vadd.f32 %v72, %v115
    %v159 = vadd.f32 %v73, %v116
    %v160 = vadd.f32 %v74, %v117
    %v161 = vadd.f32 %v75, %v118
    %v162 = vadd.f32 %v76, %v119
    %v163 = vadd.f32 %v77, %v120
    %v164 = vadd.f32 %v78, %v121
    %v165 = vadd.f32 %v79, %v122
    %v166 = vadd.f32 %v80, %v123
    %v167 = vadd.f32 %v81, %v124
    %v168 = vadd.f32 %v82, %v125
    %169 = vst [vmem:[#allocation7] sm:$0xff] %v126
    %170 = vst [vmem:[#allocation7 + $0x8] sm:$0xff] %v127
    %171 = vst [vmem:[#allocation7 + $0x10] sm:$0xff] %v128
    %172 = vst [vmem:[#allocation7 + $0x18] sm:$0xff] %v129
    %173 = vst [vmem:[#allocation7 + $0x20] sm:$0xff] %v130
    %174 = vst [vmem:[#allocation7 + $0x28] sm:$0xff] %v131
    %175 = vst [vmem:[#allocation7 + $0x30] sm:$0xff] %v132
    %176 = vst [vmem:[#allocation7 + $0x38] sm:$0xff] %v133
    %177 = vst [vmem:[#allocation7 + $0x40] sm:$0xff] %v134
    %178 = vst [vmem:[#allocation7 + $0x48] sm:$0xff] %v135
    %179 = vst [vmem:[#allocation7 + $0x50] sm:$0xff] %v136
    %180 = vst [vmem:[#allocation7 + $0x58] sm:$0xff] %v137
    %181 = vst [vmem:[#allocation7 + $0x60] sm:$0xff] %v138
    %182 = vst [vmem:[#allocation7 + $0x68] sm:$0xff] %v139
    %183 = vst [vmem:[#allocation7 + $0x70] sm:$0xff] %v140
    %184 = vst [vmem:[#allocation7 + $0x78] sm:$0xff] %v141
    %185 = vst [vmem:[#allocation7 + $0x80] sm:$0xff] %v142
    %186 = vst [vmem:[#allocation7 + $0x88] sm:$0xff] %v143
    %187 = vst [vmem:[#allocation7 + $0x90] sm:$0xff] %v144
    %188 = vst [vmem:[#allocation7 + $0x98] sm:$0xff] %v145
    %189 = vst [vmem:[#allocation7 + $0xa0] sm:$0xff] %v146
    %190 = vst [vmem:[#allocation7 + $0xa8] sm:$0xff] %v147
    %191 = vst [vmem:[#allocation7 + $0xb0] sm:$0xff] %v148
    %192 = vst [vmem:[#allocation7 + $0xb8] sm:$0xff] %v149
    %193 = vst [vmem:[#allocation7 + $0xc0] sm:$0xff] %v150
    %194 = vst [vmem:[#allocation7 + $0xc8] sm:$0xff] %v151
    %195 = vst [vmem:[#allocation7 + $0xd0] sm:$0xff] %v152
    %196 = vst [vmem:[#allocation7 + $0xd8] sm:$0xff] %v153
    %197 = vst [vmem:[#allocation7 + $0xe0] sm:$0xff] %v154
    %198 = vst [vmem:[#allocation7 + $0xe8] sm:$0xff] %v155
    %199 = vst [vmem:[#allocation7 + $0xf0] sm:$0xff] %v156
    %200 = vst [vmem:[#allocation7 + $0xf8] sm:$0xff] %v157
    %201 = vst [vmem:[#allocation7 + $0x100] sm:$0xff] %v158
    %202 = vst [vmem:[#allocation7 + $0x108] sm:$0xff] %v159
    %203 = vst [vmem:[#allocation7 + $0x110] sm:$0xff] %v160
    %204 = vst [vmem:[#allocation7 + $0x118] sm:$0xff] %v161
    %205 = vst [vmem:[#allocation7 + $0x120] sm:$0xff] %v162
    %206 = vst [vmem:[#allocation7 + $0x128] sm:$0xff] %v163
    %207 = vst [vmem:[#allocation7 + $0x130] sm:$0xff] %v164
    %208 = vst [vmem:[#allocation7 + $0x138] sm:$0xff] %v165
    %209 = vst [vmem:[#allocation7 + $0x140] sm:$0xff] %v166
    %210 = vst [vmem:[#allocation7 + $0x148] sm:$0xff] %v167
    %211 = vst [vmem:[#allocation7 + $0x150] sm:$0x7f] %v168
    // Predicated region
    $region18: #{tpu_custom_call.1} parent=1 // pred_check
      _
    $region19: #{tpu_custom_call.1} parent=1 // pred_check_branch
      %213 = sbr.rel (0) target = $region21
    $region20: #{tpu_custom_call.1} parent=1 // pred_region
      %s215 = ssub.s32 5504, 5504
      %216 = vsyncadd [#allocation4], %s215
      %s217 = sshll.u32 [#allocation7], 4
      %s218 = int_to_ptr.vmem [resolvable:$true] %s217
      %223 = dma.vmem_to_hbm [thread:$0]  %s218, 5504, %s2, [#allocation4], 128, 128, 8
    $region21: #{tpu_custom_call.1} parent=1 // pred_fallthru
      _
    // Predicated region
    $region22: #{tpu_custom_call.1} parent=1 // pred_check
      _
    $region23: #{tpu_custom_call.1} parent=1 // pred_check_branch
      %225 = sbr.rel (0) target = $region25
    $region24: #{tpu_custom_call.1} parent=1 // pred_region
      %226 = dma.done [#allocation4], 5504
    $region25: #{tpu_custom_call.1} parent=1 // pred_fallthru
      _
    %227 = vsyncpa [#allocation3], 1
    %228 = vsyncpa [#allocation6], 1
    %229 = vsyncpa [#allocation4], 1

</llo_original>
